<compile_context>
chip_gen: v5e
topology: v5e:2x2
jax: 0.10.0
libtpu: 0.0.40
codegen_flags: <defaults>
</compile_context>

<pallas_src>
import functools

import jax
import jax.numpy as jnp
from jax.experimental import pallas as pl
from jax.experimental.pallas import tpu as pltpu


def _round_up(v, m):
    return (v + m - 1) // m * m


def _vmem_capacity_bytes():
    try:
        return int(pltpu.get_tpu_info().vmem_capacity_bytes)
    except Exception:
        return 64 * 1024 * 1024  # conservative per-TC fallback (v7x)


def _ebm_kernel(n_layers, n_steps, approx_sigmoid, *refs):
    """refs = (x_ref, w0..w{L-1}, b0..b{L-1}, out_ref).

    x_ref:  [TILE_B, IN_PAD] (bf16 on the fast path, f32 otherwise)
    w_i:    [IN_PAD_i, OUT_PAD_i] (bf16/f32, VMEM-resident, single-buffered)
    b_i:    [1, OUT_PAD_i] f32
    out:    [TILE_B, OUT_PAD_last] f32
    """
    x_ref = refs[0]
    w_refs = refs[1:1 + n_layers]
    b_refs = refs[1 + n_layers:1 + 2 * n_layers]
    out_ref = refs[1 + 2 * n_layers]

    if n_steps == 0:
        # Relaxation never ran: states[-1] stays at its zero initialization.
        out_ref[...] = jnp.zeros_like(out_ref)
        return

    # Single fixed-point evaluation of the layer chain (exact for n_steps >= 1).
    h = x_ref[...]
    for i in range(n_layers):
        # Load each weight/bias right before its dot (no whole-chain hoist).
        w = w_refs[i][...]
        b = b_refs[i][...]
        pre = jnp.dot(h.astype(w.dtype), w,
                      preferred_element_type=jnp.float32) + b
        if approx_sigmoid:
            # exp on EUP + approx reciprocal on EUP: keeps the VALU free.
            h = pl.reciprocal(1.0 + jnp.exp(-pre), approx=True)
        else:
            h = jax.nn.sigmoid(pre)  # exact f32 path
    out_ref[...] = h.astype(out_ref.dtype)


def prepare_ebm_params(weights, biases, *, use_bf16=True):
    """One-time parameter prep: pad feature dims to 128 lanes, cast weights.

    Returns (padded_weights, padded_biases, out_dim). Do this once per model, not
    per forward call.
    """
    n_layers = len(weights)
    dims = [weights[0].shape[0]] + [w.shape[1] for w in weights]
    dims_pad = [_round_up(d, 128) for d in dims]
    w_dtype = jnp.bfloat16 if use_bf16 else jnp.float32

    w_p = tuple(
        jnp.pad(weights[i].astype(jnp.float32),
                ((0, dims_pad[i] - dims[i]),
                 (0, dims_pad[i + 1] - dims[i + 1]))).astype(w_dtype)
        for i in range(n_layers))
    b_p = tuple(
        jnp.pad(biases[i].astype(jnp.float32).reshape(1, -1),
                ((0, 0), (0, dims_pad[i + 1] - dims[i + 1])))
        for i in range(n_layers))
    return w_p, b_p, dims[-1]


@functools.partial(jax.jit,
                   static_argnames=("n_steps", "tile_b", "out_dim",
                                    "approx_sigmoid"))
def _ebm_forward_padded(x, w_p, b_p, *, n_steps, tile_b, out_dim,
                        approx_sigmoid):
    n_layers = len(w_p)
    batch, in_dim = x.shape
    dims_pad = [w_p[0].shape[0]] + [w.shape[1] for w in w_p]
    x_dtype = w_p[0].dtype  # stream x in the weight dtype (bf16 fast path)

    # ---- batch tiling: rows multiple of 8 sublanes, >=2 grid steps when possible
    #      so the ("parallel",) axis can span both TensorCores on v7x ----
    batch8 = _round_up(batch, 8)
    tb = _round_up(min(tile_b, batch8), 8)
    if batch8 > 8 and -(-batch8 // tb) < 2:
        tb = _round_up(-(-batch8 // 2), 8)
    batch_pad = _round_up(batch8, tb)
    grid = (batch_pad // tb,)

    x_p = jnp.pad(x.astype(x_dtype),
                  ((0, batch_pad - batch), (0, dims_pad[0] - in_dim)))

    # ---- BlockSpecs: x/out tiled over batch; weights/biases VMEM-resident
    #      (constant index_map) and single-buffered ----
    x_spec = pl.BlockSpec((tb, dims_pad[0]), lambda b: (b, 0))
    w_specs = [pl.BlockSpec((dims_pad[i], dims_pad[i + 1]), lambda b: (0, 0),
                            pipeline_mode=pl.Buffered(1))
               for i in range(n_layers)]
    b_specs = [pl.BlockSpec((1, dims_pad[i + 1]), lambda b: (0, 0),
                            pipeline_mode=pl.Buffered(1))
               for i in range(n_layers)]
    out_spec = pl.BlockSpec((tb, dims_pad[-1]), lambda b: (b, 0))

    # ---- VMEM budget: resident (single-buffered) weights/biases + streamed
    #      double-buffered x/out tiles + intermediates, capped at 75% capacity ----
    f32 = 4
    w_bytes = jnp.dtype(x_dtype).itemsize
    resident = sum(dims_pad[i] * dims_pad[i + 1] for i in range(n_layers)) * w_bytes
    resident += sum(8 * dims_pad[i + 1] for i in range(n_layers)) * f32
    streamed = 2 * tb * dims_pad[0] * w_bytes + 2 * tb * dims_pad[-1] * f32
    interm = 3 * tb * max(dims_pad) * f32
    needed = resident + streamed + interm
    budget = int(0.75 * _vmem_capacity_bytes())
    # TODO(synk): if `resident` alone exceeds ~70% of `budget` (wide layers on
    # v7x's 64 MiB VMEM), stream the largest weight over K with an inner
    # pltpu.emit_pipeline instead of forcing full residency.
    vmem_limit = int(max(16 * 1024 * 1024, min(budget, needed + (4 << 20))))

    kernel = functools.partial(_ebm_kernel, n_layers, n_steps, approx_sigmoid)

    out_p = pl.pallas_call(
        kernel,
        out_shape=jax.ShapeDtypeStruct((batch_pad, dims_pad[-1]), jnp.float32),
        grid=grid,
        in_specs=[x_spec] + w_specs + b_specs,
        out_specs=out_spec,
        compiler_params=pltpu.CompilerParams(
            dimension_semantics=("parallel",),
            vmem_limit_bytes=vmem_limit),
    )(x_p, *w_p, *b_p)

    # Slice off batch padding and padded output lanes (which hold sigmoid(0)=0.5).
    return out_p[:batch, :out_dim]


def ebm_forward(x, weights, biases, *, n_steps=20, use_bf16=True, tile_b=512):
    """Eval-mode forward of EnergyBasedModel via a single fused Pallas kernel.

    bf16 fast path: weights/x in bf16 on the MXU with f32 accumulation and an
    EUP approx-reciprocal sigmoid (documented contract: ~3e-2 tolerance vs f32).
    """
    w_p, b_p, out_dim = prepare_ebm_params(weights, biases, use_bf16=use_bf16)
    return _ebm_forward_padded(x, w_p, b_p, n_steps=n_steps, tile_b=tile_b,
                               out_dim=out_dim, approx_sigmoid=use_bf16)


def ebm_forward_ref(x, weights, biases, *, n_steps=20):
    """Pure-JAX reference mirroring the PyTorch negative() loop literally."""
    h_final = jnp.zeros((x.shape[0], weights[-1].shape[1]), jnp.float32)
    for _ in range(n_steps):
        h = x
        for w, b in zip(weights, biases):
            h = jax.nn.sigmoid(h @ w + b)
        h_final = h
    return h_final


if __name__ == "__main__":
    # Small deterministic configuration consistent with the module's __init__:
    #   layer_sizes = [input_size] + hidden_sizes
    input_size = 32
    hidden_sizes = [64, 32]
    layer_sizes = [input_size] + hidden_sizes
    n_steps = 20
    batch = 8

    key = jax.random.PRNGKey(0)
    keys = jax.random.split(key, len(layer_sizes))

    # Parameter init: randn(in, out) / sqrt(in), biases zero (as in the module).
    weights, biases = [], []
    for i in range(len(layer_sizes) - 1):
        w = (jax.random.normal(keys[i], (layer_sizes[i], layer_sizes[i + 1]),
                               dtype=jnp.float32)
             / jnp.sqrt(jnp.float32(layer_sizes[i])))
        weights.append(w)
        biases.append(jnp.zeros((layer_sizes[i + 1],), jnp.float32))

    x = jax.random.normal(keys[-1], (batch, input_size), dtype=jnp.float32)

    ref = ebm_forward_ref(x, weights, biases, n_steps=n_steps)

    # Exact structural check (f32 everywhere, exact sigmoid).
    out_f32 = jax.block_until_ready(
        ebm_forward(x, weights, biases, n_steps=n_steps, use_bf16=False))
    assert out_f32.shape == (batch, layer_sizes[-1])
    assert jnp.allclose(out_f32, ref, atol=1e-5, rtol=1e-5)

    # Fast path: bf16 weights/inputs, f32 accumulation, approx-reciprocal sigmoid.
    out_bf16 = jax.block_until_ready(
        ebm_forward(x, weights, biases, n_steps=n_steps, use_bf16=True))
    assert out_bf16.shape == (batch, layer_sizes[-1])
    assert jnp.allclose(out_bf16, ref, atol=3e-2, rtol=3e-2)

    # n_steps == 0: relaxation never runs, states[-1] stays zero.
    out_zero = jax.block_until_ready(
        ebm_forward(x, weights, biases, n_steps=0))
    assert jnp.allclose(out_zero, jnp.zeros_like(out_zero))

    print("KERNEL_OK")
</pallas_src>

<mosaic_0001>
module attributes {stable_mosaic.version = 11 : i64} {
  func.func @_ebm_kernel(%arg0: i32, %arg1: memref<8x128xf32, #tpu.memory_space<vmem>>, %arg2: memref<128x128xf32, #tpu.memory_space<vmem>>, %arg3: memref<128x128xf32, #tpu.memory_space<vmem>>, %arg4: memref<1x128xf32, #tpu.memory_space<vmem>>, %arg5: memref<1x128xf32, #tpu.memory_space<vmem>>, %arg6: memref<8x128xf32, #tpu.memory_space<vmem>>) attributes {dimension_semantics = [#tpu.dimension_semantics<parallel>], iteration_bounds = array<i64: 1>, scalar_prefetch = 0 : i64, scratch_operands = 0 : i64, tpu.core_type = #tpu.core_type<tc>, window_params = [{transform_indices = @transform_0, window_bounds = array<i64: 8, 128>}, {pipeline_mode = #tpu.pipeline_mode<synchronous>, transform_indices = @transform_1, window_bounds = array<i64: 128, 128>}, {pipeline_mode = #tpu.pipeline_mode<synchronous>, transform_indices = @transform_2, window_bounds = array<i64: 128, 128>}, {pipeline_mode = #tpu.pipeline_mode<synchronous>, transform_indices = @transform_3, window_bounds = array<i64: 1, 128>}, {pipeline_mode = #tpu.pipeline_mode<synchronous>, transform_indices = @transform_4, window_bounds = array<i64: 1, 128>}, {transform_indices = @transform_5, window_bounds = array<i64: 8, 128>}]} {
    %c0 = arith.constant 0 : index
    %c0_0 = arith.constant 0 : index
    %0 = vector.load %arg1[%c0, %c0_0] : memref<8x128xf32, #tpu.memory_space<vmem>>, vector<8x128xf32>
    %c0_1 = arith.constant 0 : index
    %c0_2 = arith.constant 0 : index
    %1 = vector.load %arg2[%c0_1, %c0_2] : memref<128x128xf32, #tpu.memory_space<vmem>>, vector<128x128xf32>
    %c0_3 = arith.constant 0 : index
    %c0_4 = arith.constant 0 : index
    %2 = vector.load %arg4[%c0_3, %c0_4] : memref<1x128xf32, #tpu.memory_space<vmem>>, vector<1x128xf32>
    %cst = arith.constant dense<0.000000e+00> : vector<8x128xf32>
    %3 = tpu.matmul %0, %1, %cst {dimension_numbers = #tpu.dot_dimension_numbers<[1], [0], [0], [1], [0, 0, 1, 1], [], []>} : vector<8x128xf32>, vector<128x128xf32>, vector<8x128xf32> -> vector<8x128xf32>
    %4 = vector.broadcast %2 : vector<1x128xf32> to vector<8x128xf32>
    %5 = arith.addf %3, %4 : vector<8x128xf32>
    %6 = arith.negf %5 : vector<8x128xf32>
    %7 = math.exp %6 : vector<8x128xf32>
    %cst_5 = arith.constant 1.000000e+00 : f32
    %8 = vector.broadcast %cst_5 : f32 to vector<8x128xf32>
    %9 = arith.addf %8, %7 : vector<8x128xf32>
    %10 = arith.divf %8, %9 : vector<8x128xf32>
    %c0_6 = arith.constant 0 : index
    %c0_7 = arith.constant 0 : index
    %11 = vector.load %arg3[%c0_6, %c0_7] : memref<128x128xf32, #tpu.memory_space<vmem>>, vector<128x128xf32>
    %c0_8 = arith.constant 0 : index
    %c0_9 = arith.constant 0 : index
    %12 = vector.load %arg5[%c0_8, %c0_9] : memref<1x128xf32, #tpu.memory_space<vmem>>, vector<1x128xf32>
    %cst_10 = arith.constant dense<0.000000e+00> : vector<8x128xf32>
    %13 = tpu.matmul %10, %11, %cst_10 {dimension_numbers = #tpu.dot_dimension_numbers<[1], [0], [0], [1], [0, 0, 1, 1], [], []>} : vector<8x128xf32>, vector<128x128xf32>, vector<8x128xf32> -> vector<8x128xf32>
    %14 = vector.broadcast %12 : vector<1x128xf32> to vector<8x128xf32>
    %15 = arith.addf %13, %14 : vector<8x128xf32>
    %16 = arith.negf %15 : vector<8x128xf32>
    %17 = math.exp %16 : vector<8x128xf32>
    %cst_11 = arith.constant 1.000000e+00 : f32
    %18 = vector.broadcast %cst_11 : f32 to vector<8x128xf32>
    %19 = arith.addf %18, %17 : vector<8x128xf32>
    %20 = arith.divf %18, %19 : vector<8x128xf32>
    %c0_12 = arith.constant 0 : index
    %c0_13 = arith.constant 0 : index
    %21 = vector.load %arg6[%c0_12, %c0_13] : memref<8x128xf32, #tpu.memory_space<vmem>>, vector<8x128xf32>
    tpu.vector_store %arg6[%c0_12, %c0_13], %20 {strides = array<i32>} : memref<8x128xf32, #tpu.memory_space<vmem>>, vector<8x128xf32>,
    return
  }
  func.func @transform_0(%arg0: i32) -> (i32, i32) {
    %c0_i32 = arith.constant 0 : i32
    %c0_i32_0 = arith.constant 0 : i32
    return %arg0, %c0_i32 : i32, i32
  }
  func.func @transform_1(%arg0: i32) -> (i32, i32) {
    %c0_i32 = arith.constant 0 : i32
    %c0_i32_0 = arith.constant 0 : i32
    %c0_i32_1 = arith.constant 0 : i32
    return %c0_i32, %c0_i32_0 : i32, i32
  }
  func.func @transform_2(%arg0: i32) -> (i32, i32) {
    %c0_i32 = arith.constant 0 : i32
    %c0_i32_0 = arith.constant 0 : i32
    %c0_i32_1 = arith.constant 0 : i32
    return %c0_i32, %c0_i32_0 : i32, i32
  }
  func.func @transform_3(%arg0: i32) -> (i32, i32) {
    %c0_i32 = arith.constant 0 : i32
    %c0_i32_0 = arith.constant 0 : i32
    %c0_i32_1 = arith.constant 0 : i32
    return %c0_i32, %c0_i32_0 : i32, i32
  }
  func.func @transform_4(%arg0: i32) -> (i32, i32) {
    %c0_i32 = arith.constant 0 : i32
    %c0_i32_0 = arith.constant 0 : i32
    %c0_i32_1 = arith.constant 0 : i32
    return %c0_i32, %c0_i32_0 : i32, i32
  }
  func.func @transform_5(%arg0: i32) -> (i32, i32) {
    %c0_i32 = arith.constant 0 : i32
    %c0_i32_0 = arith.constant 0 : i32
    return %arg0, %c0_i32 : i32, i32
  }
}

</mosaic_0001>

<llo_original>
// kernel: _ebm_forward_padded.1
$region0: #{_ebm_forward_padded.1}
  #allocation0 [shape = 'u32[]', space=smem, size = 0x4, offset = 0x4, fixed_abs, tag = 'smem constant byte address 0x4 - core index']
  #allocation1 [shape = 'u32[72,128]{1,0:T(1,128)}', space=vmem, size = 0x9000, scoped, tag = 'internal scratch']
  %s0 = inlined_call_operand.vmem [shape: f32[8,128], index: 0, kind: input, shape index: {}]
  %s1 = inlined_call_operand.hbm [shape: f32[128,128], index: 1, kind: input, shape index: {}]
  %s2 = inlined_call_operand.hbm [shape: f32[128,128], index: 2, kind: input, shape index: {}]
  %s3 = inlined_call_operand.vmem [shape: f32[1,128], index: 3, kind: input, shape index: {}]
  %s4 = inlined_call_operand.vmem [shape: f32[1,128], index: 4, kind: input, shape index: {}]
  %s5 = inlined_call_operand.hbm [shape: f32[8,128], index: 5, kind: output, shape index: {}]
  %s6 = sld [smem:[#allocation0]]
  $region38: #{_ebm_forward_padded.1} parent=0
    _
  %s8 = ssub.s32 1, %s6
  %s9 = scalar_select 0, %s8, %s6
  $region1: #{_ebm_forward_padded.1} parent=0
    #allocation2 [shape = 'u8[65536]{0}', space=vmem, size = 0x10000, scoped, tag = 'input window, operand 1, single buffered']
    #allocation3 [shape = 's32[1]{0}', space=sflag, size = 0x4, scoped, tag = 'scoped memory for _ebm_forward_padded.1']
    #allocation4 [shape = 's32[1]{0}', space=sflag, size = 0x4, scoped, tag = 'scoped memory for _ebm_forward_padded.1']
    #allocation5 [shape = 'u8[65536]{0}', space=vmem, size = 0x10000, scoped, tag = 'input window, operand 2, single buffered']
    #allocation6 [shape = 's32[1]{0}', space=sflag, size = 0x4, scoped, tag = 'scoped memory for _ebm_forward_padded.1']
    #allocation7 [shape = 'u8[4096]{0}', space=vmem, size = 0x1000, scoped, tag = 'output window, operand 0, single buffered']
    %10 = vsyncpa [#allocation3], 0
    %11 = vsyncpa [#allocation6], 0
    %12 = vsyncpa [#allocation4], 0
    // Predicated region
    $region2: #{_ebm_forward_padded.1} parent=1 // pred_check
      _
    $region3: #{_ebm_forward_padded.1} parent=1 // pred_check_branch
      %14 = sbr.rel (0) target = $region5
    $region4: #{_ebm_forward_padded.1} parent=1 // pred_region
      _
    $region5: #{_ebm_forward_padded.1} parent=1 // pred_fallthru
      _
    // Predicated region
    $region6: #{_ebm_forward_padded.1} parent=1 // pred_check
      _
    $region7: #{_ebm_forward_padded.1} parent=1 // pred_check_branch
      %16 = sbr.rel (0) target = $region9
    $region8: #{_ebm_forward_padded.1} parent=1 // pred_region
      %18 = vsyncadd [#allocation3], 0
      %s19 = sshll.u32 %s1, 4
      %s20 = int_to_ptr.hbm [resolvable:$true] %s19
      %s21 = sshll.u32 [#allocation2], 4
      %s22 = int_to_ptr.vmem [resolvable:$true] %s21
      %27 = dma.hbm_to_vmem [thread:$0]  %s20, 2048, %s22, [#allocation3], 128, 128, 8
    $region9: #{_ebm_forward_padded.1} parent=1 // pred_fallthru
      _
    // Predicated region
    $region10: #{_ebm_forward_padded.1} parent=1 // pred_check
      _
    $region11: #{_ebm_forward_padded.1} parent=1 // pred_check_branch
      %29 = sbr.rel (0) target = $region13
    $region12: #{_ebm_forward_padded.1} parent=1 // pred_region
      %31 = vsyncadd [#allocation6], 0
      %s32 = sshll.u32 %s2, 4
      %s33 = int_to_ptr.hbm [resolvable:$true] %s32
      %s34 = sshll.u32 [#allocation5], 4
      %s35 = int_to_ptr.vmem [resolvable:$true] %s34
      %40 = dma.hbm_to_vmem [thread:$0]  %s33, 2048, %s35, [#allocation6], 128, 128, 8
    $region13: #{_ebm_forward_padded.1} parent=1 // pred_fallthru
      _
    // Predicated region
    $region14: #{_ebm_forward_padded.1} parent=1 // pred_check
      _
    $region15: #{_ebm_forward_padded.1} parent=1 // pred_check_branch
      %42 = sbr.rel (0) target = $region17
    $region16: #{_ebm_forward_padded.1} parent=1 // pred_region
      _
    $region17: #{_ebm_forward_padded.1} parent=1 // pred_fallthru
      _
    // Predicated region
    $region18: #{_ebm_forward_padded.1} parent=1 // pred_check
      _
    $region19: #{_ebm_forward_padded.1} parent=1 // pred_check_branch
      %44 = sbr.rel (0) target = $region21
    $region20: #{_ebm_forward_padded.1} parent=1 // pred_region
      _
    $region21: #{_ebm_forward_padded.1} parent=1 // pred_fallthru
      _
    // Predicated region
    $region22: #{_ebm_forward_padded.1} parent=1 // pred_check
      _
    $region23: #{_ebm_forward_padded.1} parent=1 // pred_check_branch
      %46 = sbr.rel (0) target = $region25
    $region24: #{_ebm_forward_padded.1} parent=1 // pred_region
      %48 = dma.done [#allocation3], 2048
    $region25: #{_ebm_forward_padded.1} parent=1 // pred_fallthru
      _
    // Predicated region
    $region26: #{_ebm_forward_padded.1} parent=1 // pred_check
      _
    $region27: #{_ebm_forward_padded.1} parent=1 // pred_check_branch
      %50 = sbr.rel (0) target = $region29
    $region28: #{_ebm_forward_padded.1} parent=1 // pred_region
      %52 = dma.done [#allocation6], 2048
    $region29: #{_ebm_forward_padded.1} parent=1 // pred_fallthru
      _
    %v53 = vld [vmem:[%s0] sm:$0xff]
    %v54 = vld [vmem:[#allocation2] sm:$0xff]
    %v55 = vld [vmem:[#allocation2 + $0x8] sm:$0xff]
    %v56 = vld [vmem:[#allocation2 + $0x10] sm:$0xff]
    %v57 = vld [vmem:[#allocation2 + $0x18] sm:$0xff]
    %v58 = vld [vmem:[#allocation2 + $0x20] sm:$0xff]
    %v59 = vld [vmem:[#allocation2 + $0x28] sm:$0xff]
    %v60 = vld [vmem:[#allocation2 + $0x30] sm:$0xff]
    %v61 = vld [vmem:[#allocation2 + $0x38] sm:$0xff]
    %v62 = vld [vmem:[#allocation2 + $0x40] sm:$0xff]
    %v63 = vld [vmem:[#allocation2 + $0x48] sm:$0xff]
    %v64 = vld [vmem:[#allocation2 + $0x50] sm:$0xff]
    %v65 = vld [vmem:[#allocation2 + $0x58] sm:$0xff]
    %v66 = vld [vmem:[#allocation2 + $0x60] sm:$0xff]
    %v67 = vld [vmem:[#allocation2 + $0x68] sm:$0xff]
    %v68 = vld [vmem:[#allocation2 + $0x70] sm:$0xff]
    %v69 = vld [vmem:[#allocation2 + $0x78] sm:$0xff]
    %v70 = vld [vmem:[%s3] sm:$0x1]
    %v72 = vperm.slane %v70, 0
    %74 = vmatpush.msra.mxu0 %v69
    %75 = vmatpush.msra.mxu0 %v68
    %76 = vmatpush.msra.mxu0 %v67
    %77 = vmatpush.msra.mxu0 %v66
    %78 = vmatpush.msra.mxu0 %v65
    %79 = vmatpush.msra.mxu0 %v64
    %80 = vmatpush.msra.mxu0 %v63
    %81 = vmatpush.msra.mxu0 %v62
    %82 = vmatpush.msra.mxu0 %v61
    %83 = vmatpush.msra.mxu0 %v60
    %84 = vmatpush.msra.mxu0 %v59
    %85 = vmatpush.msra.mxu0 %v58
    %86 = vmatpush.msra.mxu0 %v57
    %87 = vmatpush.msra.mxu0 %v56
    %88 = vmatpush.msra.mxu0 %v55
    %89 = vmatpush.msra.mxu0 %v54
    %90 = vmatmul.f32.gmra.mxu0 %v53
    %v91 = vpop.f32.mrf.mxu0
    %v92 = vadd.f32 %v72, %v91
    %93 = vdwg.mxu0
    %v94 = vxor.u32 %v92, 2147483648
    %v95 = vmul.f32 %v94, 1.442695
    %v96 = vpow.pop %v95
    %v97 = vadd.f32 %v96, 1.0
    %v98 = vrcp.pop %v97
    %v99 = vmul.f32 %v97, %v98
    %v100 = vsub.f32 1.0, %v99
    %v101 = vmul.f32 %v98, %v100
    %v102 = vadd.f32 %v98, %v101
    %vm103 = vweird.f32 %v97
    %vm104 = vweird.f32 %v98
    %vm105 = vmor %vm103, %vm104
    %v106 = vsel %vm105, %v98, %v102
    %v107 = vand.u32 2147483647, %v97
    %vm108 = vcmp.eq.f32.partialorder %v107, 8.507059e+37
    %v109 = vand.u32 %v97, 2147483648
    %v110 = vor.u32 1.1754944e-38, %v109
    %v111 = vsel %vm108, %v110, %v106
    %v112 = vmul.f32 1.0, %v111
    %v113 = vld [vmem:[#allocation5] sm:$0xff]
    %v114 = vld [vmem:[#allocation5 + $0x8] sm:$0xff]
    %v115 = vld [vmem:[#allocation5 + $0x10] sm:$0xff]
    %v116 = vld [vmem:[#allocation5 + $0x18] sm:$0xff]
    %v117 = vld [vmem:[#allocation5 + $0x20] sm:$0xff]
    %v118 = vld [vmem:[#allocation5 + $0x28] sm:$0xff]
    %v119 = vld [vmem:[#allocation5 + $0x30] sm:$0xff]
    %v120 = vld [vmem:[#allocation5 + $0x38] sm:$0xff]
    %v121 = vld [vmem:[#allocation5 + $0x40] sm:$0xff]
    %v122 = vld [vmem:[#allocation5 + $0x48] sm:$0xff]
    %v123 = vld [vmem:[#allocation5 + $0x50] sm:$0xff]
    %v124 = vld [vmem:[#allocation5 + $0x58] sm:$0xff]
    %v125 = vld [vmem:[#allocation5 + $0x60] sm:$0xff]
    %v126 = vld [vmem:[#allocation5 + $0x68] sm:$0xff]
    %v127 = vld [vmem:[#allocation5 + $0x70] sm:$0xff]
    %v128 = vld [vmem:[#allocation5 + $0x78] sm:$0xff]
    %v129 = vld [vmem:[%s4] sm:$0x1]
    %v131 = vperm.slane %v129, 0
    %133 = vmatpush.msra.mxu0 %v128
    %134 = vmatpush.msra.mxu0 %v127
    %135 = vmatpush.msra.mxu0 %v126
    %136 = vmatpush.msra.mxu0 %v125
    %137 = vmatpush.msra.mxu0 %v124
    %138 = vmatpush.msra.mxu0 %v123
    %139 = vmatpush.msra.mxu0 %v122
    %140 = vmatpush.msra.mxu0 %v121
    %141 = vmatpush.msra.mxu0 %v120
    %142 = vmatpush.msra.mxu0 %v119
    %143 = vmatpush.msra.mxu0 %v118
    %144 = vmatpush.msra.mxu0 %v117
    %145 = vmatpush.msra.mxu0 %v116
    %146 = vmatpush.msra.mxu0 %v115
    %147 = vmatpush.msra.mxu0 %v114
    %148 = vmatpush.msra.mxu0 %v113
    %149 = vmatmul.f32.gmra.mxu0 %v112
    %v150 = vpop.f32.mrf.mxu0
    %v151 = vadd.f32 %v131, %v150
    %152 = vdwg.mxu0
    %v153 = vxor.u32 %v151, 2147483648
    %v154 = vmul.f32 %v153, 1.442695
    %v155 = vpow.pop %v154
    %v156 = vadd.f32 %v155, 1.0
    %v157 = vrcp.pop %v156
    %v158 = vmul.f32 %v156, %v157
    %v159 = vsub.f32 1.0, %v158
    %v160 = vmul.f32 %v157, %v159
    %v161 = vadd.f32 %v157, %v160
    %vm162 = vweird.f32 %v156
    %vm163 = vweird.f32 %v157
    %vm164 = vmor %vm162, %vm163
    %v165 = vsel %vm164, %v157, %v161
    %v166 = vand.u32 2147483647, %v156
    %vm167 = vcmp.eq.f32.partialorder %v166, 8.507059e+37
    %v168 = vand.u32 %v156, 2147483648
    %v169 = vor.u32 1.1754944e-38, %v168
    %v170 = vsel %vm167, %v169, %v165
    %v171 = vmul.f32 1.0, %v170
    %172 = vst [vmem:[#allocation7] sm:$0xff] %v171
    // Predicated region
    $region30: #{_ebm_forward_padded.1} parent=1 // pred_check
      _
    $region31: #{_ebm_forward_padded.1} parent=1 // pred_check_branch
      %174 = sbr.rel (0) target = $region33
    $region32: #{_ebm_forward_padded.1} parent=1 // pred_region
      %176 = vsyncadd [#allocation4], 0
      %s178 = sshll.u32 [#allocation7], 4
      %s179 = int_to_ptr.vmem [resolvable:$true] %s178
      %s180 = sshll.u32 %s5, 4
      %s181 = int_to_ptr.hbm [resolvable:$true] %s180
      %183 = dma.vmem_to_hbm [thread:$0]  %s179, 128, %s181, [#allocation4]
    $region33: #{_ebm_forward_padded.1} parent=1 // pred_fallthru
      _
    // Predicated region
    $region34: #{_ebm_forward_padded.1} parent=1 // pred_check
      _
    $region35: #{_ebm_forward_padded.1} parent=1 // pred_check_branch
      %185 = sbr.rel (0) target = $region37
    $region36: #{_ebm_forward_padded.1} parent=1 // pred_region
      %187 = dma.done [#allocation4], 128
    $region37: #{_ebm_forward_padded.1} parent=1 // pred_fallthru
      _
    %188 = vsyncpa [#allocation3], 1
    %189 = vsyncpa [#allocation6], 1
    %190 = vsyncpa [#allocation4], 1

</llo_original>
